<compile_context>
chip_gen: v7x
topology: tpu7x:2x2x1
jax: 0.10.0
libtpu: 0.0.40
codegen_flags: <defaults>
</compile_context>

<pallas_src>
import functools
import math

import jax
import jax.numpy as jnp
from jax.experimental import pallas as pl
from jax.experimental.pallas import tpu as pltpu


def _attention_head(f1_col, f2_row, mask, h, alpha):
    """Masked attention softmax + aggregation for one head (all in vregs)."""
    e = f1_col + f2_row                              # (N, N) broadcast add
    e = jnp.where(e > 0, e, alpha * e)               # LeakyReLU(alpha)
    e = jnp.where(mask, e, jnp.float32(-9e15))       # adjacency mask
    e = e - jnp.max(e, axis=1, keepdims=True)        # stable softmax
    p = jnp.exp(e)
    denom = jnp.sum(p, axis=1, keepdims=True)
    att = p * pl.reciprocal(denom, approx=True)      # EUP vrcp, co-issues
    # TODO(synk): F.dropout on attention weights is identity in eval mode; omitted.
    return jnp.dot(att, h, preferred_element_type=jnp.float32)


def _gat_forward_kernel(x_ref, adj_ref, w_ref, a_ref, wo_ref, ao_ref, out_ref,
                        *, nheads, nhid, alpha):
    x = x_ref[...].astype(jnp.float32)

    # All heads' hidden features in one lane-dense MXU matmul: (N, nheads*nhid).
    H = jnp.dot(x, w_ref[...], preferred_element_type=jnp.float32)

    # All heads' score projections in one matmul against a block-diagonal
    # projector: scores[:, 2k] = H_k @ a1_k, scores[:, 2k+1] = H_k @ a2_k.
    scores = jnp.dot(H, a_ref[...], preferred_element_type=jnp.float32)   # (N, 2*nheads)
    scores_T = scores.T     # one sublane->lane relayout for all heads  (2*nheads, N)

    mask = adj_ref[...] != 0                                              # (N, N) bool

    # ----- multi-head layer (concat=True: ELU per head) -----
    heads = []
    for k in range(nheads):
        f1 = scores[:, 2 * k:2 * k + 1]          # (N, 1)  "self" score column
        f2 = scores_T[2 * k + 1:2 * k + 2, :]    # (1, N)  "neighbor" score row
        hk = H[:, k * nhid:(k + 1) * nhid]
        hp = _attention_head(f1, f2, mask, hk, alpha)
        heads.append(jnp.where(hp > 0, hp, jnp.exp(hp) - 1.0))            # ELU
    h_cat = jnp.concatenate(heads, axis=1)          # (N, nheads*nhid), stays in VMEM

    # ----- output attention layer (concat=False) + elu + log_softmax -----
    Ho = jnp.dot(h_cat, wo_ref[...], preferred_element_type=jnp.float32)  # (N, nclass)
    Fo = jnp.dot(Ho, ao_ref[...], preferred_element_type=jnp.float32)     # (N, 2)
    Fo_T = Fo.T
    hp = _attention_head(Fo[:, 0:1], Fo_T[1:2, :], mask, Ho, alpha)
    hp = jnp.where(hp > 0, hp, jnp.exp(hp) - 1.0)                         # F.elu
    m = jnp.max(hp, axis=1, keepdims=True)                                # log_softmax
    z = hp - m
    out = z - jnp.log(jnp.sum(jnp.exp(z), axis=1, keepdims=True))

    out_ref[...] = out.astype(out_ref.dtype)


def gat_forward(x, adj, params, *, alpha):
    """Fused GAT forward: one pallas_call for all heads + concat + output layer."""
    N, nfeat = x.shape
    heads = params["attentions"]
    nheads = len(heads)
    nhid = heads[0][0].shape[1]
    W_out, a_out = params["out_att"]
    nclass = W_out.shape[1]

    # F.dropout(x) — identity in eval mode.

    # Stack per-head weights so the kernel does one wide matmul per stage.
    W_stacked = jnp.concatenate([W for W, _ in heads], axis=1)        # (nfeat, nheads*nhid)
    A_stacked = jnp.zeros((nheads * nhid, 2 * nheads), jnp.float32)   # block-diag projector
    for k, (_, a) in enumerate(heads):
        A_stacked = A_stacked.at[k * nhid:(k + 1) * nhid, 2 * k].set(a[:nhid, 0])
        A_stacked = A_stacked.at[k * nhid:(k + 1) * nhid, 2 * k + 1].set(a[nhid:, 0])
    A_out = jnp.concatenate([a_out[:nclass], a_out[nclass:]], axis=1)  # (nclass, 2)

    # adj is only used as a mask -> ship it as int8 (4x fewer DMA bytes vs f32).
    adj_i8 = (adj != 0).astype(jnp.int8)

    kernel = functools.partial(_gat_forward_kernel,
                               nheads=nheads, nhid=nhid, alpha=alpha)

    return pl.pallas_call(
        kernel,
        out_shape=jax.ShapeDtypeStruct((N, nclass), jnp.float32),
        grid=(1,),
        in_specs=[
            pl.BlockSpec((N, nfeat), lambda i: (0, 0)),
            pl.BlockSpec((N, N), lambda i: (0, 0)),
            pl.BlockSpec((nfeat, nheads * nhid), lambda i: (0, 0)),
            pl.BlockSpec((nheads * nhid, 2 * nheads), lambda i: (0, 0)),
            pl.BlockSpec((nheads * nhid, nclass), lambda i: (0, 0)),
            pl.BlockSpec((nclass, 2), lambda i: (0, 0)),
        ],
        out_specs=pl.BlockSpec((N, nclass), lambda i: (0, 0)),
        compiler_params=pltpu.CompilerParams(
            dimension_semantics=("arbitrary",)),
    )(x, adj_i8, W_stacked, A_stacked, W_out, A_out)


def xavier_uniform(key, shape, gain):
    fan_in, fan_out = shape[0], shape[1]
    bound = gain * math.sqrt(6.0 / (fan_in + fan_out))
    return jax.random.uniform(key, shape, jnp.float32, -bound, bound)


def init_gat_params(key, nfeat, nhid, nclass, nheads):
    params = {"attentions": [], "out_att": None}
    gain = 1.414
    for _ in range(nheads):
        key, kw, ka = jax.random.split(key, 3)
        W = xavier_uniform(kw, (nfeat, nhid), gain)
        a = xavier_uniform(ka, (2 * nhid, 1), gain)
        params["attentions"].append((W, a))
    key, kw, ka = jax.random.split(key, 3)
    W_out = xavier_uniform(kw, (nhid * nheads, nclass), gain)
    a_out = xavier_uniform(ka, (2 * nclass, 1), gain)
    params["out_att"] = (W_out, a_out)
    return params


if __name__ == "__main__":
    # Small, deterministic problem sizes.
    N = 16        # number of graph nodes
    nfeat = 32
    nhid = 8
    nclass = 4
    nheads = 2
    alpha = 0.2   # LeakyReLU slope
    dropout = 0.6  # unused at eval time

    key = jax.random.PRNGKey(0)
    key, kx, kadj, kparams = jax.random.split(key, 4)

    x = jax.random.normal(kx, (N, nfeat), jnp.float32)
    # random sparse-ish adjacency with self-loops (self-loops guarantee no
    # fully-masked attention row).
    adj = (jax.random.uniform(kadj, (N, N)) > 0.7).astype(jnp.float32)
    adj = jnp.maximum(adj, jnp.eye(N, dtype=jnp.float32))

    params = init_gat_params(kparams, nfeat, nhid, nclass, nheads)

    out = gat_forward(x, adj, params, alpha=alpha)
    jax.block_until_ready(out)

    assert out.shape == (N, nclass)
    # rows of log_softmax must exponentiate-sum to 1
    row_sums = jnp.sum(jnp.exp(out), axis=1)
    assert bool(jnp.all(jnp.abs(row_sums - 1.0) < 1e-4))

    print("KERNEL_OK")
</pallas_src>

<mosaic_0001>
module attributes {stable_mosaic.version = 11 : i64} {
  func.func @_gat_forward_kernel(%arg0: i32, %arg1: memref<16x32xf32, #tpu.memory_space<vmem>>, %arg2: memref<16x16xi8, #tpu.memory_space<vmem>>, %arg3: memref<32x16xf32, #tpu.memory_space<vmem>>, %arg4: memref<16x4xf32, #tpu.memory_space<vmem>>, %arg5: memref<16x4xf32, #tpu.memory_space<vmem>>, %arg6: memref<4x2xf32, #tpu.memory_space<vmem>>, %arg7: memref<16x4xf32, #tpu.memory_space<vmem>>) attributes {dimension_semantics = [#tpu.dimension_semantics<arbitrary>], iteration_bounds = array<i64: 1>, scalar_prefetch = 0 : i64, scratch_operands = 0 : i64, tpu.core_type = #tpu.core_type<tc>, window_params = [{pipeline_mode = #tpu.pipeline_mode<synchronous>, transform_indices = @transform_0, window_bounds = array<i64: 16, 32>}, {pipeline_mode = #tpu.pipeline_mode<synchronous>, transform_indices = @transform_1, window_bounds = array<i64: 16, 16>}, {pipeline_mode = #tpu.pipeline_mode<synchronous>, transform_indices = @transform_2, window_bounds = array<i64: 32, 16>}, {pipeline_mode = #tpu.pipeline_mode<synchronous>, transform_indices = @transform_3, window_bounds = array<i64: 16, 4>}, {pipeline_mode = #tpu.pipeline_mode<synchronous>, transform_indices = @transform_4, window_bounds = array<i64: 16, 4>}, {pipeline_mode = #tpu.pipeline_mode<synchronous>, transform_indices = @transform_5, window_bounds = array<i64: 4, 2>}, {pipeline_mode = #tpu.pipeline_mode<synchronous>, transform_indices = @transform_6, window_bounds = array<i64: 16, 4>}]} {
    %c0 = arith.constant 0 : index
    %c0_0 = arith.constant 0 : index
    %0 = vector.load %arg1[%c0, %c0_0] : memref<16x32xf32, #tpu.memory_space<vmem>>, vector<16x32xf32>
    %c0_1 = arith.constant 0 : index
    %c0_2 = arith.constant 0 : index
    %1 = vector.load %arg3[%c0_1, %c0_2] : memref<32x16xf32, #tpu.memory_space<vmem>>, vector<32x16xf32>
    %cst = arith.constant dense<0.000000e+00> : vector<16x16xf32>
    %2 = tpu.matmul %0, %1, %cst {dimension_numbers = #tpu.dot_dimension_numbers<[1], [0], [0], [1], [0, 0, 1, 1], [], []>} : vector<16x32xf32>, vector<32x16xf32>, vector<16x16xf32> -> vector<16x16xf32>
    %c0_3 = arith.constant 0 : index
    %c0_4 = arith.constant 0 : index
    %3 = vector.load %arg4[%c0_3, %c0_4] : memref<16x4xf32, #tpu.memory_space<vmem>>, vector<16x4xf32>
    %cst_5 = arith.constant dense<0.000000e+00> : vector<16x4xf32>
    %4 = tpu.matmul %2, %3, %cst_5 {dimension_numbers = #tpu.dot_dimension_numbers<[1], [0], [0], [1], [0, 0, 1, 1], [], []>} : vector<16x16xf32>, vector<16x4xf32>, vector<16x4xf32> -> vector<16x4xf32>
    %5 = tpu.transpose %4, [1, 0] : vector<16x4xf32> -> vector<4x16xf32>
    %c0_6 = arith.constant 0 : index
    %c0_7 = arith.constant 0 : index
    %6 = vector.load %arg2[%c0_6, %c0_7] : memref<16x16xi8, #tpu.memory_space<vmem>>, vector<16x16xi8>
    %c0_i8 = arith.constant 0 : i8
    %7 = vector.broadcast %c0_i8 : i8 to vector<16x16xi8>
    %8 = arith.cmpi ne, %6, %7 : vector<16x16xi8>
    %9 = vector.extract_strided_slice %4 {offsets = [0, 0], sizes = [16, 1], strides = [1, 1]} : vector<16x4xf32> to vector<16x1xf32>
    %10 = vector.extract_strided_slice %5 {offsets = [1, 0], sizes = [1, 16], strides = [1, 1]} : vector<4x16xf32> to vector<1x16xf32>
    %11 = vector.extract_strided_slice %2 {offsets = [0, 0], sizes = [16, 8], strides = [1, 1]} : vector<16x16xf32> to vector<16x8xf32>
    %12 = vector.broadcast %9 : vector<16x1xf32> to vector<16x16xf32>
    %13 = vector.broadcast %10 : vector<1x16xf32> to vector<16x16xf32>
    %14 = arith.addf %12, %13 : vector<16x16xf32>
    %cst_8 = arith.constant 0.000000e+00 : f32
    %15 = vector.broadcast %cst_8 : f32 to vector<16x16xf32>
    %16 = arith.cmpf ogt, %14, %15 : vector<16x16xf32>
    %cst_9 = arith.constant 2.000000e-01 : f32
    %17 = vector.broadcast %cst_9 : f32 to vector<16x16xf32>
    %18 = arith.mulf %17, %14 : vector<16x16xf32>
    %19 = arith.select %16, %14, %18 : vector<16x16xi1>, vector<16x16xf32>
    %cst_10 = arith.constant -9.000000e+15 : f32
    %20 = vector.broadcast %cst_10 : f32 to vector<16x16xf32>
    %21 = arith.select %8, %19, %20 : vector<16x16xi1>, vector<16x16xf32>
    %cst_11 = arith.constant dense<0xFF800000> : vector<16xf32>
    %22 = vector.multi_reduction <maximumf>, %21, %cst_11 [1] : vector<16x16xf32> to vector<16xf32>
    %23 = vector.shape_cast %22 : vector<16xf32> to vector<16x1xf32>
    %24 = vector.broadcast %23 : vector<16x1xf32> to vector<16x16xf32>
    %25 = arith.subf %21, %24 : vector<16x16xf32>
    %26 = math.exp %25 : vector<16x16xf32>
    %cst_12 = arith.constant dense<0.000000e+00> : vector<16xf32>
    %27 = vector.multi_reduction <add>, %26, %cst_12 [1] : vector<16x16xf32> to vector<16xf32>
    %28 = vector.shape_cast %27 : vector<16xf32> to vector<16x1xf32>
    %29 = tpu.reciprocal %28 {approx = true} : vector<16x1xf32> -> vector<16x1xf32>
    %30 = vector.broadcast %29 : vector<16x1xf32> to vector<16x16xf32>
    %31 = arith.mulf %26, %30 : vector<16x16xf32>
    %cst_13 = arith.constant dense<0.000000e+00> : vector<16x8xf32>
    %32 = tpu.matmul %31, %11, %cst_13 {dimension_numbers = #tpu.dot_dimension_numbers<[1], [0], [0], [1], [0, 0, 1, 1], [], []>} : vector<16x16xf32>, vector<16x8xf32>, vector<16x8xf32> -> vector<16x8xf32>
    %cst_14 = arith.constant 0.000000e+00 : f32
    %33 = vector.broadcast %cst_14 : f32 to vector<16x8xf32>
    %34 = arith.cmpf ogt, %32, %33 : vector<16x8xf32>
    %35 = math.exp %32 : vector<16x8xf32>
    %cst_15 = arith.constant 1.000000e+00 : f32
    %36 = vector.broadcast %cst_15 : f32 to vector<16x8xf32>
    %37 = arith.subf %35, %36 : vector<16x8xf32>
    %38 = arith.select %34, %32, %37 : vector<16x8xi1>, vector<16x8xf32>
    %39 = vector.extract_strided_slice %4 {offsets = [0, 2], sizes = [16, 1], strides = [1, 1]} : vector<16x4xf32> to vector<16x1xf32>
    %40 = vector.extract_strided_slice %5 {offsets = [3, 0], sizes = [1, 16], strides = [1, 1]} : vector<4x16xf32> to vector<1x16xf32>
    %41 = vector.extract_strided_slice %2 {offsets = [0, 8], sizes = [16, 8], strides = [1, 1]} : vector<16x16xf32> to vector<16x8xf32>
    %42 = vector.broadcast %39 : vector<16x1xf32> to vector<16x16xf32>
    %43 = vector.broadcast %40 : vector<1x16xf32> to vector<16x16xf32>
    %44 = arith.addf %42, %43 : vector<16x16xf32>
    %cst_16 = arith.constant 0.000000e+00 : f32
    %45 = vector.broadcast %cst_16 : f32 to vector<16x16xf32>
    %46 = arith.cmpf ogt, %44, %45 : vector<16x16xf32>
    %cst_17 = arith.constant 2.000000e-01 : f32
    %47 = vector.broadcast %cst_17 : f32 to vector<16x16xf32>
    %48 = arith.mulf %47, %44 : vector<16x16xf32>
    %49 = arith.select %46, %44, %48 : vector<16x16xi1>, vector<16x16xf32>
    %cst_18 = arith.constant -9.000000e+15 : f32
    %50 = vector.broadcast %cst_18 : f32 to vector<16x16xf32>
    %51 = arith.select %8, %49, %50 : vector<16x16xi1>, vector<16x16xf32>
    %cst_19 = arith.constant dense<0xFF800000> : vector<16xf32>
    %52 = vector.multi_reduction <maximumf>, %51, %cst_19 [1] : vector<16x16xf32> to vector<16xf32>
    %53 = vector.shape_cast %52 : vector<16xf32> to vector<16x1xf32>
    %54 = vector.broadcast %53 : vector<16x1xf32> to vector<16x16xf32>
    %55 = arith.subf %51, %54 : vector<16x16xf32>
    %56 = math.exp %55 : vector<16x16xf32>
    %cst_20 = arith.constant dense<0.000000e+00> : vector<16xf32>
    %57 = vector.multi_reduction <add>, %56, %cst_20 [1] : vector<16x16xf32> to vector<16xf32>
    %58 = vector.shape_cast %57 : vector<16xf32> to vector<16x1xf32>
    %59 = tpu.reciprocal %58 {approx = true} : vector<16x1xf32> -> vector<16x1xf32>
    %60 = vector.broadcast %59 : vector<16x1xf32> to vector<16x16xf32>
    %61 = arith.mulf %56, %60 : vector<16x16xf32>
    %cst_21 = arith.constant dense<0.000000e+00> : vector<16x8xf32>
    %62 = tpu.matmul %61, %41, %cst_21 {dimension_numbers = #tpu.dot_dimension_numbers<[1], [0], [0], [1], [0, 0, 1, 1], [], []>} : vector<16x16xf32>, vector<16x8xf32>, vector<16x8xf32> -> vector<16x8xf32>
    %cst_22 = arith.constant 0.000000e+00 : f32
    %63 = vector.broadcast %cst_22 : f32 to vector<16x8xf32>
    %64 = arith.cmpf ogt, %62, %63 : vector<16x8xf32>
    %65 = math.exp %62 : vector<16x8xf32>
    %cst_23 = arith.constant 1.000000e+00 : f32
    %66 = vector.broadcast %cst_23 : f32 to vector<16x8xf32>
    %67 = arith.subf %65, %66 : vector<16x8xf32>
    %68 = arith.select %64, %62, %67 : vector<16x8xi1>, vector<16x8xf32>
    %69 = tpu.concatenate %38, %68 in 1 : vector<16x8xf32>, vector<16x8xf32> -> vector<16x16xf32>
    %c0_24 = arith.constant 0 : index
    %c0_25 = arith.constant 0 : index
    %70 = vector.load %arg5[%c0_24, %c0_25] : memref<16x4xf32, #tpu.memory_space<vmem>>, vector<16x4xf32>
    %cst_26 = arith.constant dense<0.000000e+00> : vector<16x4xf32>
    %71 = tpu.matmul %69, %70, %cst_26 {dimension_numbers = #tpu.dot_dimension_numbers<[1], [0], [0], [1], [0, 0, 1, 1], [], []>} : vector<16x16xf32>, vector<16x4xf32>, vector<16x4xf32> -> vector<16x4xf32>
    %c0_27 = arith.constant 0 : index
    %c0_28 = arith.constant 0 : index
    %72 = vector.load %arg6[%c0_27, %c0_28] : memref<4x2xf32, #tpu.memory_space<vmem>>, vector<4x2xf32>
    %cst_29 = arith.constant dense<0.000000e+00> : vector<16x2xf32>
    %73 = tpu.matmul %71, %72, %cst_29 {dimension_numbers = #tpu.dot_dimension_numbers<[1], [0], [0], [1], [0, 0, 1, 1], [], []>} : vector<16x4xf32>, vector<4x2xf32>, vector<16x2xf32> -> vector<16x2xf32>
    %74 = tpu.transpose %73, [1, 0] : vector<16x2xf32> -> vector<2x16xf32>
    %75 = vector.extract_strided_slice %73 {offsets = [0, 0], sizes = [16, 1], strides = [1, 1]} : vector<16x2xf32> to vector<16x1xf32>
    %76 = vector.extract_strided_slice %74 {offsets = [1, 0], sizes = [1, 16], strides = [1, 1]} : vector<2x16xf32> to vector<1x16xf32>
    %77 = vector.broadcast %75 : vector<16x1xf32> to vector<16x16xf32>
    %78 = vector.broadcast %76 : vector<1x16xf32> to vector<16x16xf32>
    %79 = arith.addf %77, %78 : vector<16x16xf32>
    %cst_30 = arith.constant 0.000000e+00 : f32
    %80 = vector.broadcast %cst_30 : f32 to vector<16x16xf32>
    %81 = arith.cmpf ogt, %79, %80 : vector<16x16xf32>
    %cst_31 = arith.constant 2.000000e-01 : f32
    %82 = vector.broadcast %cst_31 : f32 to vector<16x16xf32>
    %83 = arith.mulf %82, %79 : vector<16x16xf32>
    %84 = arith.select %81, %79, %83 : vector<16x16xi1>, vector<16x16xf32>
    %cst_32 = arith.constant -9.000000e+15 : f32
    %85 = vector.broadcast %cst_32 : f32 to vector<16x16xf32>
    %86 = arith.select %8, %84, %85 : vector<16x16xi1>, vector<16x16xf32>
    %cst_33 = arith.constant dense<0xFF800000> : vector<16xf32>
    %87 = vector.multi_reduction <maximumf>, %86, %cst_33 [1] : vector<16x16xf32> to vector<16xf32>
    %88 = vector.shape_cast %87 : vector<16xf32> to vector<16x1xf32>
    %89 = vector.broadcast %88 : vector<16x1xf32> to vector<16x16xf32>
    %90 = arith.subf %86, %89 : vector<16x16xf32>
    %91 = math.exp %90 : vector<16x16xf32>
    %cst_34 = arith.constant dense<0.000000e+00> : vector<16xf32>
    %92 = vector.multi_reduction <add>, %91, %cst_34 [1] : vector<16x16xf32> to vector<16xf32>
    %93 = vector.shape_cast %92 : vector<16xf32> to vector<16x1xf32>
    %94 = tpu.reciprocal %93 {approx = true} : vector<16x1xf32> -> vector<16x1xf32>
    %95 = vector.broadcast %94 : vector<16x1xf32> to vector<16x16xf32>
    %96 = arith.mulf %91, %95 : vector<16x16xf32>
    %cst_35 = arith.constant dense<0.000000e+00> : vector<16x4xf32>
    %97 = tpu.matmul %96, %71, %cst_35 {dimension_numbers = #tpu.dot_dimension_numbers<[1], [0], [0], [1], [0, 0, 1, 1], [], []>} : vector<16x16xf32>, vector<16x4xf32>, vector<16x4xf32> -> vector<16x4xf32>
    %cst_36 = arith.constant 0.000000e+00 : f32
    %98 = vector.broadcast %cst_36 : f32 to vector<16x4xf32>
    %99 = arith.cmpf ogt, %97, %98 : vector<16x4xf32>
    %100 = math.exp %97 : vector<16x4xf32>
    %cst_37 = arith.constant 1.000000e+00 : f32
    %101 = vector.broadcast %cst_37 : f32 to vector<16x4xf32>
    %102 = arith.subf %100, %101 : vector<16x4xf32>
    %103 = arith.select %99, %97, %102 : vector<16x4xi1>, vector<16x4xf32>
    %cst_38 = arith.constant dense<0xFF800000> : vector<16xf32>
    %104 = vector.multi_reduction <maximumf>, %103, %cst_38 [1] : vector<16x4xf32> to vector<16xf32>
    %105 = vector.shape_cast %104 : vector<16xf32> to vector<16x1xf32>
    %106 = vector.broadcast %105 : vector<16x1xf32> to vector<16x4xf32>
    %107 = arith.subf %103, %106 : vector<16x4xf32>
    %108 = math.exp %107 : vector<16x4xf32>
    %cst_39 = arith.constant dense<0.000000e+00> : vector<16xf32>
    %109 = vector.multi_reduction <add>, %108, %cst_39 [1] : vector<16x4xf32> to vector<16xf32>
    %110 = vector.shape_cast %109 : vector<16xf32> to vector<16x1xf32>
    %111 = math.log %110 : vector<16x1xf32>
    %112 = vector.broadcast %111 : vector<16x1xf32> to vector<16x4xf32>
    %113 = arith.subf %107, %112 : vector<16x4xf32>
    %c0_40 = arith.constant 0 : index
    %c0_41 = arith.constant 0 : index
    %114 = vector.load %arg7[%c0_40, %c0_41] : memref<16x4xf32, #tpu.memory_space<vmem>>, vector<16x4xf32>
    tpu.vector_store %arg7[%c0_40, %c0_41], %113 {strides = array<i32>} : memref<16x4xf32, #tpu.memory_space<vmem>>, vector<16x4xf32>,
    return
  }
  func.func @transform_0(%arg0: i32) -> (i32, i32) {
    %c0_i32 = arith.constant 0 : i32
    %c0_i32_0 = arith.constant 0 : i32
    %c0_i32_1 = arith.constant 0 : i32
    return %c0_i32, %c0_i32_0 : i32, i32
  }
  func.func @transform_1(%arg0: i32) -> (i32, i32) {
    %c0_i32 = arith.constant 0 : i32
    %c0_i32_0 = arith.constant 0 : i32
    %c0_i32_1 = arith.constant 0 : i32
    return %c0_i32, %c0_i32_0 : i32, i32
  }
  func.func @transform_2(%arg0: i32) -> (i32, i32) {
    %c0_i32 = arith.constant 0 : i32
    %c0_i32_0 = arith.constant 0 : i32
    %c0_i32_1 = arith.constant 0 : i32
    return %c0_i32, %c0_i32_0 : i32, i32
  }
  func.func @transform_3(%arg0: i32) -> (i32, i32) {
    %c0_i32 = arith.constant 0 : i32
    %c0_i32_0 = arith.constant 0 : i32
    %c0_i32_1 = arith.constant 0 : i32
    return %c0_i32, %c0_i32_0 : i32, i32
  }
  func.func @transform_4(%arg0: i32) -> (i32, i32) {
    %c0_i32 = arith.constant 0 : i32
    %c0_i32_0 = arith.constant 0 : i32
    %c0_i32_1 = arith.constant 0 : i32
    return %c0_i32, %c0_i32_0 : i32, i32
  }
  func.func @transform_5(%arg0: i32) -> (i32, i32) {
    %c0_i32 = arith.constant 0 : i32
    %c0_i32_0 = arith.constant 0 : i32
    %c0_i32_1 = arith.constant 0 : i32
    return %c0_i32, %c0_i32_0 : i32, i32
  }
  func.func @transform_6(%arg0: i32) -> (i32, i32) {
    %c0_i32 = arith.constant 0 : i32
    %c0_i32_0 = arith.constant 0 : i32
    %c0_i32_1 = arith.constant 0 : i32
    return %c0_i32, %c0_i32_0 : i32, i32
  }
}

</mosaic_0001>

<llo_original>
// kernel: tpu_custom_call.1
$region0: #{tpu_custom_call.1}
  #allocation0 [shape = 'u32[]', space=smem, size = 0x4, offset = 0x4, fixed_abs, tag = 'smem constant byte address 0x4 - core index']
  #allocation1 [shape = 'u32[144,128]{1,0:T(1,128)}', space=vmem, size = 0x12000, scoped, tag = 'internal scratch']
  %s0 = inlined_call_operand.vmem [shape: f32[16,32], index: 0, kind: input, shape index: {}]
  %s1 = inlined_call_operand.vmem [shape: s8[16,16], index: 1, kind: input, shape index: {}]
  %s2 = inlined_call_operand.vmem [shape: f32[32,16], index: 2, kind: input, shape index: {}]
  %s3 = inlined_call_operand.vmem [shape: f32[16,4], index: 3, kind: input, shape index: {}]
  %s4 = inlined_call_operand.vmem [shape: f32[16,4], index: 4, kind: input, shape index: {}]
  %s5 = inlined_call_operand.vmem [shape: f32[4,2], index: 5, kind: input, shape index: {}]
  %s6 = inlined_call_operand.vmem [shape: f32[16,4], index: 6, kind: output, shape index: {}]
  %s7 = sld [smem:[#allocation0]]
  $region34: #{tpu_custom_call.1} parent=0
    _
  %s9 = ssub.s32 1, %s7
  %s10 = scalar_select 0, %s9, %s7
  // Predicated region
  $region2: #{tpu_custom_call.1} parent=0 // pred_check
    _
  $region3: #{tpu_custom_call.1} parent=0 // pred_check_branch
    %12 = sbr.rel (0) target = $region5
  $region4: #{tpu_custom_call.1} parent=0 // pred_region
    _
  $region5: #{tpu_custom_call.1} parent=0 // pred_fallthru
    _
  // Predicated region
  $region6: #{tpu_custom_call.1} parent=0 // pred_check
    _
  $region7: #{tpu_custom_call.1} parent=0 // pred_check_branch
    %14 = sbr.rel (0) target = $region9
  $region8: #{tpu_custom_call.1} parent=0 // pred_region
    _
  $region9: #{tpu_custom_call.1} parent=0 // pred_fallthru
    _
  // Predicated region
  $region10: #{tpu_custom_call.1} parent=0 // pred_check
    _
  $region11: #{tpu_custom_call.1} parent=0 // pred_check_branch
    %16 = sbr.rel (0) target = $region13
  $region12: #{tpu_custom_call.1} parent=0 // pred_region
    _
  $region13: #{tpu_custom_call.1} parent=0 // pred_fallthru
    _
  // Predicated region
  $region14: #{tpu_custom_call.1} parent=0 // pred_check
    _
  $region15: #{tpu_custom_call.1} parent=0 // pred_check_branch
    %18 = sbr.rel (0) target = $region17
  $region16: #{tpu_custom_call.1} parent=0 // pred_region
    _
  $region17: #{tpu_custom_call.1} parent=0 // pred_fallthru
    _
  // Predicated region
  $region18: #{tpu_custom_call.1} parent=0 // pred_check
    _
  $region19: #{tpu_custom_call.1} parent=0 // pred_check_branch
    %20 = sbr.rel (0) target = $region21
  $region20: #{tpu_custom_call.1} parent=0 // pred_region
    _
  $region21: #{tpu_custom_call.1} parent=0 // pred_fallthru
    _
  // Predicated region
  $region22: #{tpu_custom_call.1} parent=0 // pred_check
    _
  $region23: #{tpu_custom_call.1} parent=0 // pred_check_branch
    %22 = sbr.rel (0) target = $region25
  $region24: #{tpu_custom_call.1} parent=0 // pred_region
    _
  $region25: #{tpu_custom_call.1} parent=0 // pred_fallthru
    _
  %v25 = vld [vmem:[%s0] sm:$0xff]
  %v26 = vld [vmem:[%s0 + $0x8] sm:$0xff]
  %v27 = vld [vmem:[%s2] sm:$0xff]
  %v28 = vld [vmem:[%s2 + $0x8] sm:$0xff]
  %v29 = vld [vmem:[%s2 + $0x10] sm:$0xff]
  %v30 = vld [vmem:[%s2 + $0x18] sm:$0xff]
  %vm31 = vcmask 261120
  %v33 = vsel %vm31, %v25, 0
  %v36 = vsel %vm31, %v26, 0
  %38 = vmatprep.subr.mxu0 0.0
  %39 = vmatpush1.msra.mxu0 %v27
  %40 = vmatprep.subr.mxu0 0.0
  %41 = vmatpush1.msra.mxu0 %v28
  %42 = vmatprep.subr.mxu0 0.0
  %43 = vmatpush1.msra.mxu0 %v29
  %44 = vmatprep.subr.mxu0 0.0
  %45 = vmatpush1.msra.mxu0 %v30
  %46 = vmatprep.subr.mxu0 0.0
  %47 = vmatpush1.msra.mxu0 0.0
  %48 = vmatprep.subr.mxu0 0.0
  %49 = vmatpush1.msra.mxu0 0.0
  %50 = vmatprep.subr.mxu0 0.0
  %51 = vmatpush1.msra.mxu0 0.0
  %52 = vmatprep.subr.mxu0 0.0
  %53 = vmatpush1.msra.mxu0 0.0
  %54 = vmatprep.subr.mxu0 0.0
  %55 = vmatpush1.msra.mxu0 0.0
  %56 = vmatprep.subr.mxu0 0.0
  %57 = vmatpush1.msra.mxu0 0.0
  %58 = vmatprep.subr.mxu0 0.0
  %59 = vmatpush1.msra.mxu0 0.0
  %60 = vmatprep.subr.mxu0 0.0
  %61 = vmatpush1.msra.mxu0 0.0
  %62 = vmatprep.subr.mxu0 0.0
  %63 = vmatpush1.msra.mxu0 0.0
  %64 = vmatprep.subr.mxu0 0.0
  %65 = vmatpush1.msra.mxu0 0.0
  %66 = vmatprep.subr.mxu0 0.0
  %67 = vmatpush1.msra.mxu0 0.0
  %68 = vmatprep.subr.mxu0 0.0
  %69 = vmatpush1.msra.mxu0 0.0
  %70 = vmatprep.subr.mxu0 0.0
  %71 = vmatpush1.msra.mxu0 0.0
  %72 = vmatprep.subr.mxu0 0.0
  %73 = vmatpush1.msra.mxu0 0.0
  %74 = vmatprep.subr.mxu0 0.0
  %75 = vmatpush1.msra.mxu0 0.0
  %76 = vmatprep.subr.mxu0 0.0
  %77 = vmatpush1.msra.mxu0 0.0
  %78 = vmatprep.subr.mxu0 0.0
  %79 = vmatpush1.msra.mxu0 0.0
  %80 = vmatprep.subr.mxu0 0.0
  %81 = vmatpush1.msra.mxu0 0.0
  %82 = vmatprep.subr.mxu0 0.0
  %83 = vmatpush1.msra.mxu0 0.0
  %84 = vmatprep.subr.mxu0 0.0
  %85 = vmatpush1.msra.mxu0 0.0
  %86 = vmatprep.subr.mxu0 0.0
  %87 = vmatpush1.msra.mxu0 0.0
  %88 = vmatprep.subr.mxu0 0.0
  %89 = vmatpush1.msra.mxu0 0.0
  %90 = vmatprep.subr.mxu0 0.0
  %91 = vmatpush1.msra.mxu0 0.0
  %92 = vmatprep.subr.mxu0 0.0
  %93 = vmatpush1.msra.mxu0 0.0
  %94 = vmatprep.subr.mxu0 0.0
  %95 = vmatpush1.msra.mxu0 0.0
  %96 = vmatprep.subr.mxu0 0.0
  %97 = vmatpush1.msra.mxu0 0.0
  %98 = vmatprep.subr.mxu0 0.0
  %99 = vmatpush1.msra.mxu0 0.0
  %100 = vmatprep.subr.mxu0 0.0
  %101 = vmatpush1.msra.mxu0 0.0
  %102 = vmatprep.mubr.f32.mxu0 0.0
  %103 = vmatmul.mubr.f32.gmra.mrb[0].mxu0 %v33
  %v104 = vpop.f32.mrb[0].mxu0
  %v105 = vadd.f32 0.0, %v104
  %v106 = vpop.f32.mrb[0].mxu0
  %107 = vmatprep.mubr.f32.mxu0 0.0
  %108 = vmatmul.mubr.f32.gmra.mrb[0].mxu0 %v36
  %v109 = vpop.f32.mrb[0].mxu0
  %v110 = vadd.f32 0.0, %v109
  %v111 = vpop.f32.mrb[0].mxu0
  %112 = vdwg.mxu0
  %v113 = vld [vmem:[%s3] sm:$0xff]
  %v114 = vld [vmem:[%s3 + $0x8] sm:$0xff]
  %vm115 = vcmask 130048
  %v117 = vsel %vm115, %v105, 0
  %v120 = vsel %vm115, %v110, 0
  %122 = vmatprep.subr.mxu0 0.0
  %123 = vmatpush1.msra.mxu0 %v113
  %124 = vmatprep.subr.mxu0 0.0
  %125 = vmatpush1.msra.mxu0 %v114
  %126 = vmatprep.subr.mxu0 0.0
  %127 = vmatpush1.msra.mxu0 0.0
  %128 = vmatprep.subr.mxu0 0.0
  %129 = vmatpush1.msra.mxu0 0.0
  %130 = vmatprep.subr.mxu0 0.0
  %131 = vmatpush1.msra.mxu0 0.0
  %132 = vmatprep.subr.mxu0 0.0
  %133 = vmatpush1.msra.mxu0 0.0
  %134 = vmatprep.subr.mxu0 0.0
  %135 = vmatpush1.msra.mxu0 0.0
  %136 = vmatprep.subr.mxu0 0.0
  %137 = vmatpush1.msra.mxu0 0.0
  %138 = vmatprep.subr.mxu0 0.0
  %139 = vmatpush1.msra.mxu0 0.0
  %140 = vmatprep.subr.mxu0 0.0
  %141 = vmatpush1.msra.mxu0 0.0
  %142 = vmatprep.subr.mxu0 0.0
  %143 = vmatpush1.msra.mxu0 0.0
  %144 = vmatprep.subr.mxu0 0.0
  %145 = vmatpush1.msra.mxu0 0.0
  %146 = vmatprep.subr.mxu0 0.0
  %147 = vmatpush1.msra.mxu0 0.0
  %148 = vmatprep.subr.mxu0 0.0
  %149 = vmatpush1.msra.mxu0 0.0
  %150 = vmatprep.subr.mxu0 0.0
  %151 = vmatpush1.msra.mxu0 0.0
  %152 = vmatprep.subr.mxu0 0.0
  %153 = vmatpush1.msra.mxu0 0.0
  %154 = vmatprep.subr.mxu0 0.0
  %155 = vmatpush1.msra.mxu0 0.0
  %156 = vmatprep.subr.mxu0 0.0
  %157 = vmatpush1.msra.mxu0 0.0
  %158 = vmatprep.subr.mxu0 0.0
  %159 = vmatpush1.msra.mxu0 0.0
  %160 = vmatprep.subr.mxu0 0.0
  %161 = vmatpush1.msra.mxu0 0.0
  %162 = vmatprep.subr.mxu0 0.0
  %163 = vmatpush1.msra.mxu0 0.0
  %164 = vmatprep.subr.mxu0 0.0
  %165 = vmatpush1.msra.mxu0 0.0
  %166 = vmatprep.subr.mxu0 0.0
  %167 = vmatpush1.msra.mxu0 0.0
  %168 = vmatprep.subr.mxu0 0.0
  %169 = vmatpush1.msra.mxu0 0.0
  %170 = vmatprep.subr.mxu0 0.0
  %171 = vmatpush1.msra.mxu0 0.0
  %172 = vmatprep.subr.mxu0 0.0
  %173 = vmatpush1.msra.mxu0 0.0
  %174 = vmatprep.subr.mxu0 0.0
  %175 = vmatpush1.msra.mxu0 0.0
  %176 = vmatprep.subr.mxu0 0.0
  %177 = vmatpush1.msra.mxu0 0.0
  %178 = vmatprep.subr.mxu0 0.0
  %179 = vmatpush1.msra.mxu0 0.0
  %180 = vmatprep.subr.mxu0 0.0
  %181 = vmatpush1.msra.mxu0 0.0
  %182 = vmatprep.subr.mxu0 0.0
  %183 = vmatpush1.msra.mxu0 0.0
  %184 = vmatprep.subr.mxu0 0.0
  %185 = vmatpush1.msra.mxu0 0.0
  %186 = vmatprep.mubr.f32.mxu0 0.0
  %187 = vmatmul.mubr.f32.gmra.mrb[0].mxu0 %v117
  %v188 = vpop.f32.mrb[0].mxu0
  %v189 = vadd.f32 0.0, %v188
  %v190 = vpop.f32.mrb[0].mxu0
  %191 = vmatprep.mubr.f32.mxu0 0.0
  %192 = vmatmul.mubr.f32.gmra.mrb[0].mxu0 %v120
  %v193 = vpop.f32.mrb[0].mxu0
  %v194 = vadd.f32 0.0, %v193
  %v195 = vpop.f32.mrb[0].mxu0
  %196 = vdwg.mxu0
  %197 = vxpose.xlu0.b32.start [1/16] %v189, 128
  %198 = vxpose.xlu0.b32.cont [2/16] %v194, 128
  %199 = vxpose.xlu0.b32.cont [3/16] 0.0, 128
  %200 = vxpose.xlu0.b32.cont [4/16] 0.0, 128
  %201 = vxpose.xlu0.b32.cont [5/16] 0.0, 128
  %202 = vxpose.xlu0.b32.cont [6/16] 0.0, 128
  %203 = vxpose.xlu0.b32.cont [7/16] 0.0, 128
  %204 = vxpose.xlu0.b32.cont [8/16] 0.0, 128
  %205 = vxpose.xlu0.b32.cont [9/16] 0.0, 128
  %206 = vxpose.xlu0.b32.cont [10/16] 0.0, 128
  %207 = vxpose.xlu0.b32.cont [11/16] 0.0, 128
  %208 = vxpose.xlu0.b32.cont [12/16] 0.0, 128
  %209 = vxpose.xlu0.b32.cont [13/16] 0.0, 128
  %210 = vxpose.xlu0.b32.cont [14/16] 0.0, 128
  %211 = vxpose.xlu0.b32.cont [15/16] 0.0, 128
  %212 = vxpose.xlu0.b32.end [16/16] 0.0, 128
  %v213 = vpop.trf.xlu0
  %v214 = vpop.trf.xlu0
  %v215 = vpop.trf.xlu0
  %v216 = vpop.trf.xlu0
  %v217 = vpop.trf.xlu0
  %v218 = vpop.trf.xlu0
  %v219 = vpop.trf.xlu0
  %v220 = vpop.trf.xlu0
  %v221 = vpop.trf.xlu0
  %v222 = vpop.trf.xlu0
  %v223 = vpop.trf.xlu0
  %v224 = vpop.trf.xlu0
  %v225 = vpop.trf.xlu0
  %v226 = vpop.trf.xlu0
  %v227 = vpop.trf.xlu0
  %v228 = vpop.trf.xlu0
  %v229 = vld [vmem:[%s1] sm:$0x3]
  %v230 = vld [vmem:[%s1 + $0x2] sm:$0x3]
  %vm231 = vnez %v229
  %vm232 = vnez %v230
  %234 = vset.pattern.permute.xlu0 0
  %235 = vperm.xlu0 %234, %v189
  %v236 = vpop.permute.xlu0 %235
  %239 = vset.pattern.permute.xlu0 0
  %240 = vperm.xlu0 %239, %v194
  %v241 = vpop.permute.xlu0 %240
  %v243 = vlaneseq
  %v244 = vshrl.u32 %v243, 7
  %v245 = vsub.s32 1, %v244
  %v246 = vrot.slane %v213, %v245
  %v247 = vadd.f32 %v236, %v246
  %v248 = vadd.f32 %v241, %v246
  %vm249 = vcmp.gt.f32.partialorder %v247, 0.0
  %vm250 = vcmp.gt.f32.partialorder %v248, 0.0
  %v251 = vmul.f32 %v247, 0.2
  %v252 = vmul.f32 %v248, 0.2
  %v253 = vsel %vm249, %v247, %v251
  %v254 = vsel %vm250, %v248, %v252
  %v255 = vsel %vm231, 16843009, 0
  %v256 = vsel %vm232, 16843009, 0
  %v257 = vunpack.c.0.s8 %v255
  %v258 = vunpack.c.0.s8 %v256
  %vm259 = vcmp.ne.s32.totalorder %v257, 0
  %vm260 = vcmp.ne.s32.totalorder %v258, 0
  %v261 = vsel %vm259, %v253, -9e+15
  %v262 = vsel %vm260, %v254, -9e+15
  %v263 = vsel %vm115, %v261, -inf
  %264 = vmax.xlane.f32.xlu0 %v263
  %v265 = vpop.xlane.xlu0 %264
  %v266 = vsel %vm115, %v262, -inf
  %267 = vmax.xlane.f32.xlu0 %v266
  %v268 = vpop.xlane.xlu0 %267
  %v269 = vsub.f32 %v261, %v265
  %v270 = vsub.f32 %v262, %v268
  %v271 = vmul.f32 %v269, 1.442695
  %v272 = vpow.pop %v271
  %v273 = vmul.f32 %v270, 1.442695
  %v274 = vpow.pop %v273
  %v275 = vsel %vm115, %v272, 0.0
  %276 = vadd.xlane.f32.xlu0 %v275
  %v277 = vpop.xlane.xlu0 %276
  %v278 = vsel %vm115, %v274, 0.0
  %279 = vadd.xlane.f32.xlu0 %v278
  %v280 = vpop.xlane.xlu0 %279
  %v281 = vrcp.pop %v277
  %v282 = vrcp.pop %v280
  %v283 = vmul.f32 %v272, %v281
  %v284 = vmul.f32 %v274, %v282
  %v286 = vsel %vm115, %v283, 0
  %v289 = vsel %vm115, %v284, 0
  %291 = vmatprep.subr.mxu0 0.0
  %292 = vmatpush1.msra.mxu0 %v105
  %293 = vmatprep.subr.mxu0 0.0
  %294 = vmatpush1.msra.mxu0 %v110
  %295 = vmatprep.subr.mxu0 0.0
  %296 = vmatpush1.msra.mxu0 0.0
  %297 = vmatprep.subr.mxu0 0.0
  %298 = vmatpush1.msra.mxu0 0.0
  %299 = vmatprep.subr.mxu0 0.0
  %300 = vmatpush1.msra.mxu0 0.0
  %301 = vmatprep.subr.mxu0 0.0
  %302 = vmatpush1.msra.mxu0 0.0
  %303 = vmatprep.subr.mxu0 0.0
  %304 = vmatpush1.msra.mxu0 0.0
  %305 = vmatprep.subr.mxu0 0.0
  %306 = vmatpush1.msra.mxu0 0.0
  %307 = vmatprep.subr.mxu0 0.0
  %308 = vmatpush1.msra.mxu0 0.0
  %309 = vmatprep.subr.mxu0 0.0
  %310 = vmatpush1.msra.mxu0 0.0
  %311 = vmatprep.subr.mxu0 0.0
  %312 = vmatpush1.msra.mxu0 0.0
  %313 = vmatprep.subr.mxu0 0.0
  %314 = vmatpush1.msra.mxu0 0.0
  %315 = vmatprep.subr.mxu0 0.0
  %316 = vmatpush1.msra.mxu0 0.0
  %317 = vmatprep.subr.mxu0 0.0
  %318 = vmatpush1.msra.mxu0 0.0
  %319 = vmatprep.subr.mxu0 0.0
  %320 = vmatpush1.msra.mxu0 0.0
  %321 = vmatprep.subr.mxu0 0.0
  %322 = vmatpush1.msra.mxu0 0.0
  %323 = vmatprep.subr.mxu0 0.0
  %324 = vmatpush1.msra.mxu0 0.0
  %325 = vmatprep.subr.mxu0 0.0
  %326 = vmatpush1.msra.mxu0 0.0
  %327 = vmatprep.subr.mxu0 0.0
  %328 = vmatpush1.msra.mxu0 0.0
  %329 = vmatprep.subr.mxu0 0.0
  %330 = vmatpush1.msra.mxu0 0.0
  %331 = vmatprep.subr.mxu0 0.0
  %332 = vmatpush1.msra.mxu0 0.0
  %333 = vmatprep.subr.mxu0 0.0
  %334 = vmatpush1.msra.mxu0 0.0
  %335 = vmatprep.subr.mxu0 0.0
  %336 = vmatpush1.msra.mxu0 0.0
  %337 = vmatprep.subr.mxu0 0.0
  %338 = vmatpush1.msra.mxu0 0.0
  %339 = vmatprep.subr.mxu0 0.0
  %340 = vmatpush1.msra.mxu0 0.0
  %341 = vmatprep.subr.mxu0 0.0
  %342 = vmatpush1.msra.mxu0 0.0
  %343 = vmatprep.subr.mxu0 0.0
  %344 = vmatpush1.msra.mxu0 0.0
  %345 = vmatprep.subr.mxu0 0.0
  %346 = vmatpush1.msra.mxu0 0.0
  %347 = vmatprep.subr.mxu0 0.0
  %348 = vmatpush1.msra.mxu0 0.0
  %349 = vmatprep.subr.mxu0 0.0
  %350 = vmatpush1.msra.mxu0 0.0
  %351 = vmatprep.subr.mxu0 0.0
  %352 = vmatpush1.msra.mxu0 0.0
  %353 = vmatprep.subr.mxu0 0.0
  %354 = vmatpush1.msra.mxu0 0.0
  %355 = vmatprep.mubr.f32.mxu0 0.0
  %356 = vmatmul.mubr.f32.gmra.mrb[0].mxu0 %v286
  %v357 = vpop.f32.mrb[0].mxu0
  %v358 = vadd.f32 0.0, %v357
  %v359 = vpop.f32.mrb[0].mxu0
  %360 = vmatprep.mubr.f32.mxu0 0.0
  %361 = vmatmul.mubr.f32.gmra.mrb[0].mxu0 %v289
  %v362 = vpop.f32.mrb[0].mxu0
  %v363 = vadd.f32 0.0, %v362
  %v364 = vpop.f32.mrb[0].mxu0
  %365 = vdwg.mxu0
  %vm366 = vcmp.gt.f32.partialorder %v358, 0.0
  %vm367 = vcmp.gt.f32.partialorder %v363, 0.0
  %v368 = vmul.f32 %v358, 1.442695
  %v369 = vpow.pop %v368
  %v370 = vmul.f32 %v363, 1.442695
  %v371 = vpow.pop %v370
  %v372 = vsub.f32 %v369, 1.0
  %v373 = vsub.f32 %v371, 1.0
  %v374 = vsel %vm366, %v358, %v372
  %v375 = vsel %vm367, %v363, %v373
  %376 = vset.pattern.permute.xlu0 2
  %377 = vperm.xlu0 %376, %v189
  %v378 = vpop.permute.xlu0 %377
  %380 = vset.pattern.permute.xlu0 2
  %381 = vperm.xlu0 %380, %v194
  %v382 = vpop.permute.xlu0 %381
  %v384 = vlaneseq
  %v385 = vshrl.u32 %v384, 7
  %v386 = vsub.s32 3, %v385
  %v387 = vrot.slane %v213, %v386
  %v388 = vadd.f32 %v378, %v387
  %v389 = vadd.f32 %v382, %v387
  %vm390 = vcmp.gt.f32.partialorder %v388, 0.0
  %vm391 = vcmp.gt.f32.partialorder %v389, 0.0
  %v392 = vmul.f32 %v388, 0.2
  %v393 = vmul.f32 %v389, 0.2
  %v394 = vsel %vm390, %v388, %v392
  %v395 = vsel %vm391, %v389, %v393
  %v396 = vsel %vm259, %v394, -9e+15
  %v397 = vsel %vm260, %v395, -9e+15
  %v398 = vsel %vm115, %v396, -inf
  %399 = vmax.xlane.f32.xlu0 %v398
  %v400 = vpop.xlane.xlu0 %399
  %v401 = vsel %vm115, %v397, -inf
  %402 = vmax.xlane.f32.xlu0 %v401
  %v403 = vpop.xlane.xlu0 %402
  %v404 = vsub.f32 %v396, %v400
  %v405 = vsub.f32 %v397, %v403
  %v406 = vmul.f32 %v404, 1.442695
  %v407 = vpow.pop %v406
  %v408 = vmul.f32 %v405, 1.442695
  %v409 = vpow.pop %v408
  %v410 = vsel %vm115, %v407, 0.0
  %411 = vadd.xlane.f32.xlu0 %v410
  %v412 = vpop.xlane.xlu0 %411
  %v413 = vsel %vm115, %v409, 0.0
  %414 = vadd.xlane.f32.xlu0 %v413
  %v415 = vpop.xlane.xlu0 %414
  %v416 = vrcp.pop %v412
  %v417 = vrcp.pop %v415
  %v418 = vmul.f32 %v407, %v416
  %v419 = vmul.f32 %v409, %v417
  %420 = vrot.lane.b32.xlu0 %v105, 120
  %v421 = vpop.permute.xlu0 %420
  %422 = vrot.lane.b32.xlu0 %v110, 120
  %v423 = vpop.permute.xlu0 %422
  %v427 = vsel %vm115, %v418, 0
  %v430 = vsel %vm115, %v419, 0
  %432 = vmatprep.subr.mxu0 0.0
  %433 = vmatpush1.msra.mxu0 %v421
  %434 = vmatprep.subr.mxu0 0.0
  %435 = vmatpush1.msra.mxu0 %v423
  %436 = vmatprep.subr.mxu0 0.0
  %437 = vmatpush1.msra.mxu0 0.0
  %438 = vmatprep.subr.mxu0 0.0
  %439 = vmatpush1.msra.mxu0 0.0
  %440 = vmatprep.subr.mxu0 0.0
  %441 = vmatpush1.msra.mxu0 0.0
  %442 = vmatprep.subr.mxu0 0.0
  %443 = vmatpush1.msra.mxu0 0.0
  %444 = vmatprep.subr.mxu0 0.0
  %445 = vmatpush1.msra.mxu0 0.0
  %446 = vmatprep.subr.mxu0 0.0
  %447 = vmatpush1.msra.mxu0 0.0
  %448 = vmatprep.subr.mxu0 0.0
  %449 = vmatpush1.msra.mxu0 0.0
  %450 = vmatprep.subr.mxu0 0.0
  %451 = vmatpush1.msra.mxu0 0.0
  %452 = vmatprep.subr.mxu0 0.0
  %453 = vmatpush1.msra.mxu0 0.0
  %454 = vmatprep.subr.mxu0 0.0
  %455 = vmatpush1.msra.mxu0 0.0
  %456 = vmatprep.subr.mxu0 0.0
  %457 = vmatpush1.msra.mxu0 0.0
  %458 = vmatprep.subr.mxu0 0.0
  %459 = vmatpush1.msra.mxu0 0.0
  %460 = vmatprep.subr.mxu0 0.0
  %461 = vmatpush1.msra.mxu0 0.0
  %462 = vmatprep.subr.mxu0 0.0
  %463 = vmatpush1.msra.mxu0 0.0
  %464 = vmatprep.subr.mxu0 0.0
  %465 = vmatpush1.msra.mxu0 0.0
  %466 = vmatprep.subr.mxu0 0.0
  %467 = vmatpush1.msra.mxu0 0.0
  %468 = vmatprep.subr.mxu0 0.0
  %469 = vmatpush1.msra.mxu0 0.0
  %470 = vmatprep.subr.mxu0 0.0
  %471 = vmatpush1.msra.mxu0 0.0
  %472 = vmatprep.subr.mxu0 0.0
  %473 = vmatpush1.msra.mxu0 0.0
  %474 = vmatprep.subr.mxu0 0.0
  %475 = vmatpush1.msra.mxu0 0.0
  %476 = vmatprep.subr.mxu0 0.0
  %477 = vmatpush1.msra.mxu0 0.0
  %478 = vmatprep.subr.mxu0 0.0
  %479 = vmatpush1.msra.mxu0 0.0
  %480 = vmatprep.subr.mxu0 0.0
  %481 = vmatpush1.msra.mxu0 0.0
  %482 = vmatprep.subr.mxu0 0.0
  %483 = vmatpush1.msra.mxu0 0.0
  %484 = vmatprep.subr.mxu0 0.0
  %485 = vmatpush1.msra.mxu0 0.0
  %486 = vmatprep.subr.mxu0 0.0
  %487 = vmatpush1.msra.mxu0 0.0
  %488 = vmatprep.subr.mxu0 0.0
  %489 = vmatpush1.msra.mxu0 0.0
  %490 = vmatprep.subr.mxu0 0.0
  %491 = vmatpush1.msra.mxu0 0.0
  %492 = vmatprep.subr.mxu0 0.0
  %493 = vmatpush1.msra.mxu0 0.0
  %494 = vmatprep.subr.mxu0 0.0
  %495 = vmatpush1.msra.mxu0 0.0
  %496 = vmatprep.mubr.f32.mxu0 0.0
  %497 = vmatmul.mubr.f32.gmra.mrb[0].mxu0 %v427
  %v498 = vpop.f32.mrb[0].mxu0
  %v499 = vadd.f32 0.0, %v498
  %v500 = vpop.f32.mrb[0].mxu0
  %501 = vmatprep.mubr.f32.mxu0 0.0
  %502 = vmatmul.mubr.f32.gmra.mrb[0].mxu0 %v430
  %v503 = vpop.f32.mrb[0].mxu0
  %v504 = vadd.f32 0.0, %v503
  %v505 = vpop.f32.mrb[0].mxu0
  %506 = vdwg.mxu0
  %vm507 = vcmp.gt.f32.partialorder %v499, 0.0
  %vm508 = vcmp.gt.f32.partialorder %v504, 0.0
  %v509 = vmul.f32 %v499, 1.442695
  %v510 = vpow.pop %v509
  %v511 = vmul.f32 %v504, 1.442695
  %v512 = vpow.pop %v511
  %v513 = vsub.f32 %v510, 1.0
  %v514 = vsub.f32 %v512, 1.0
  %v515 = vsel %vm507, %v499, %v513
  %v516 = vsel %vm508, %v504, %v514
  %519 = vrot.lane.b32.xlu0 %v515, 8
  %v520 = vpop.permute.xlu0 %519
  %521 = vrot.lane.b32.xlu0 %v516, 8
  %v522 = vpop.permute.xlu0 %521
  %vm525 = vcmask 64512
  %v526 = vsel %vm525, %v374, %v520
  %v527 = vsel %vm525, %v375, %v522
  %v528 = vld [vmem:[%s4] sm:$0xff]
  %v529 = vld [vmem:[%s4 + $0x8] sm:$0xff]
  %v531 = vsel %vm115, %v526, 0
  %v534 = vsel %vm115, %v527, 0
  %536 = vmatprep.subr.mxu0 0.0
  %537 = vmatpush1.msra.mxu0 %v528
  %538 = vmatprep.subr.mxu0 0.0
  %539 = vmatpush1.msra.mxu0 %v529
  %540 = vmatprep.subr.mxu0 0.0
  %541 = vmatpush1.msra.mxu0 0.0
  %542 = vmatprep.subr.mxu0 0.0
  %543 = vmatpush1.msra.mxu0 0.0
  %544 = vmatprep.subr.mxu0 0.0
  %545 = vmatpush1.msra.mxu0 0.0
  %546 = vmatprep.subr.mxu0 0.0
  %547 = vmatpush1.msra.mxu0 0.0
  %548 = vmatprep.subr.mxu0 0.0
  %549 = vmatpush1.msra.mxu0 0.0
  %550 = vmatprep.subr.mxu0 0.0
  %551 = vmatpush1.msra.mxu0 0.0
  %552 = vmatprep.subr.mxu0 0.0
  %553 = vmatpush1.msra.mxu0 0.0
  %554 = vmatprep.subr.mxu0 0.0
  %555 = vmatpush1.msra.mxu0 0.0
  %556 = vmatprep.subr.mxu0 0.0
  %557 = vmatpush1.msra.mxu0 0.0
  %558 = vmatprep.subr.mxu0 0.0
  %559 = vmatpush1.msra.mxu0 0.0
  %560 = vmatprep.subr.mxu0 0.0
  %561 = vmatpush1.msra.mxu0 0.0
  %562 = vmatprep.subr.mxu0 0.0
  %563 = vmatpush1.msra.mxu0 0.0
  %564 = vmatprep.subr.mxu0 0.0
  %565 = vmatpush1.msra.mxu0 0.0
  %566 = vmatprep.subr.mxu0 0.0
  %567 = vmatpush1.msra.mxu0 0.0
  %568 = vmatprep.subr.mxu0 0.0
  %569 = vmatpush1.msra.mxu0 0.0
  %570 = vmatprep.subr.mxu0 0.0
  %571 = vmatpush1.msra.mxu0 0.0
  %572 = vmatprep.subr.mxu0 0.0
  %573 = vmatpush1.msra.mxu0 0.0
  %574 = vmatprep.subr.mxu0 0.0
  %575 = vmatpush1.msra.mxu0 0.0
  %576 = vmatprep.subr.mxu0 0.0
  %577 = vmatpush1.msra.mxu0 0.0
  %578 = vmatprep.subr.mxu0 0.0
  %579 = vmatpush1.msra.mxu0 0.0
  %580 = vmatprep.subr.mxu0 0.0
  %581 = vmatpush1.msra.mxu0 0.0
  %582 = vmatprep.subr.mxu0 0.0
  %583 = vmatpush1.msra.mxu0 0.0
  %584 = vmatprep.subr.mxu0 0.0
  %585 = vmatpush1.msra.mxu0 0.0
  %586 = vmatprep.subr.mxu0 0.0
  %587 = vmatpush1.msra.mxu0 0.0
  %588 = vmatprep.subr.mxu0 0.0
  %589 = vmatpush1.msra.mxu0 0.0
  %590 = vmatprep.subr.mxu0 0.0
  %591 = vmatpush1.msra.mxu0 0.0
  %592 = vmatprep.subr.mxu0 0.0
  %593 = vmatpush1.msra.mxu0 0.0
  %594 = vmatprep.subr.mxu0 0.0
  %595 = vmatpush1.msra.mxu0 0.0
  %596 = vmatprep.subr.mxu0 0.0
  %597 = vmatpush1.msra.mxu0 0.0
  %598 = vmatprep.subr.mxu0 0.0
  %599 = vmatpush1.msra.mxu0 0.0
  %600 = vmatprep.mubr.f32.mxu0 0.0
  %601 = vmatmul.mubr.f32.gmra.mrb[0].mxu0 %v531
  %v602 = vpop.f32.mrb[0].mxu0
  %v603 = vadd.f32 0.0, %v602
  %v604 = vpop.f32.mrb[0].mxu0
  %605 = vmatprep.mubr.f32.mxu0 0.0
  %606 = vmatmul.mubr.f32.gmra.mrb[0].mxu0 %v534
  %v607 = vpop.f32.mrb[0].mxu0
  %v608 = vadd.f32 0.0, %v607
  %v609 = vpop.f32.mrb[0].mxu0
  %610 = vdwg.mxu0
  %v611 = vld [vmem:[%s5] sm:$0xf]
  %vm612 = vcmask 31744
  %v614 = vsel %vm612, %v603, 0
  %v617 = vsel %vm612, %v608, 0
  %vm619 = vcmask 1043456
  %v621 = vsel %vm619, %v611, 0
  %623 = vmatprep.subr.mxu0 0.0
  %624 = vmatpush1.msra.mxu0 %v621
  %625 = vmatprep.subr.mxu0 0.0
  %626 = vmatpush1.msra.mxu0 0.0
  %627 = vmatprep.subr.mxu0 0.0
  %628 = vmatpush1.msra.mxu0 0.0
  %629 = vmatprep.subr.mxu0 0.0
  %630 = vmatpush1.msra.mxu0 0.0
  %631 = vmatprep.subr.mxu0 0.0
  %632 = vmatpush1.msra.mxu0 0.0
  %633 = vmatprep.subr.mxu0 0.0
  %634 = vmatpush1.msra.mxu0 0.0
  %635 = vmatprep.subr.mxu0 0.0
  %636 = vmatpush1.msra.mxu0 0.0
  %637 = vmatprep.subr.mxu0 0.0
  %638 = vmatpush1.msra.mxu0 0.0
  %639 = vmatprep.subr.mxu0 0.0
  %640 = vmatpush1.msra.mxu0 0.0
  %641 = vmatprep.subr.mxu0 0.0
  %642 = vmatpush1.msra.mxu0 0.0
  %643 = vmatprep.subr.mxu0 0.0
  %644 = vmatpush1.msra.mxu0 0.0
  %645 = vmatprep.subr.mxu0 0.0
  %646 = vmatpush1.msra.mxu0 0.0
  %647 = vmatprep.subr.mxu0 0.0
  %648 = vmatpush1.msra.mxu0 0.0
  %649 = vmatprep.subr.mxu0 0.0
  %650 = vmatpush1.msra.mxu0 0.0
  %651 = vmatprep.subr.mxu0 0.0
  %652 = vmatpush1.msra.mxu0 0.0
  %653 = vmatprep.subr.mxu0 0.0
  %654 = vmatpush1.msra.mxu0 0.0
  %655 = vmatprep.subr.mxu0 0.0
  %656 = vmatpush1.msra.mxu0 0.0
  %657 = vmatprep.subr.mxu0 0.0
  %658 = vmatpush1.msra.mxu0 0.0
  %659 = vmatprep.subr.mxu0 0.0
  %660 = vmatpush1.msra.mxu0 0.0
  %661 = vmatprep.subr.mxu0 0.0
  %662 = vmatpush1.msra.mxu0 0.0
  %663 = vmatprep.subr.mxu0 0.0
  %664 = vmatpush1.msra.mxu0 0.0
  %665 = vmatprep.subr.mxu0 0.0
  %666 = vmatpush1.msra.mxu0 0.0
  %667 = vmatprep.subr.mxu0 0.0
  %668 = vmatpush1.msra.mxu0 0.0
  %669 = vmatprep.subr.mxu0 0.0
  %670 = vmatpush1.msra.mxu0 0.0
  %671 = vmatprep.subr.mxu0 0.0
  %672 = vmatpush1.msra.mxu0 0.0
  %673 = vmatprep.subr.mxu0 0.0
  %674 = vmatpush1.msra.mxu0 0.0
  %675 = vmatprep.subr.mxu0 0.0
  %676 = vmatpush1.msra.mxu0 0.0
  %677 = vmatprep.subr.mxu0 0.0
  %678 = vmatpush1.msra.mxu0 0.0
  %679 = vmatprep.subr.mxu0 0.0
  %680 = vmatpush1.msra.mxu0 0.0
  %681 = vmatprep.subr.mxu0 0.0
  %682 = vmatpush1.msra.mxu0 0.0
  %683 = vmatprep.subr.mxu0 0.0
  %684 = vmatpush1.msra.mxu0 0.0
  %685 = vmatprep.subr.mxu0 0.0
  %686 = vmatpush1.msra.mxu0 0.0
  %687 = vmatprep.mubr.f32.mxu0 0.0
  %688 = vmatmul.mubr.f32.gmra.mrb[0].mxu0 %v614
  %v689 = vpop.f32.mrb[0].mxu0
  %v690 = vadd.f32 0.0, %v689
  %v691 = vpop.f32.mrb[0].mxu0
  %692 = vmatprep.mubr.f32.mxu0 0.0
  %693 = vmatmul.mubr.f32.gmra.mrb[0].mxu0 %v617
  %v694 = vpop.f32.mrb[0].mxu0
  %v695 = vadd.f32 0.0, %v694
  %v696 = vpop.f32.mrb[0].mxu0
  %697 = vdwg.mxu0
  %698 = vxpose.xlu0.b32.start [1/16] %v690, 128
  %699 = vxpose.xlu0.b32.cont [2/16] %v695, 128
  %700 = vxpose.xlu0.b32.cont [3/16] 0.0, 128
  %701 = vxpose.xlu0.b32.cont [4/16] 0.0, 128
  %702 = vxpose.xlu0.b32.cont [5/16] 0.0, 128
  %703 = vxpose.xlu0.b32.cont [6/16] 0.0, 128
  %704 = vxpose.xlu0.b32.cont [7/16] 0.0, 128
  %705 = vxpose.xlu0.b32.cont [8/16] 0.0, 128
  %706 = vxpose.xlu0.b32.cont [9/16] 0.0, 128
  %707 = vxpose.xlu0.b32.cont [10/16] 0.0, 128
  %708 = vxpose.xlu0.b32.cont [11/16] 0.0, 128
  %709 = vxpose.xlu0.b32.cont [12/16] 0.0, 128
  %710 = vxpose.xlu0.b32.cont [13/16] 0.0, 128
  %711 = vxpose.xlu0.b32.cont [14/16] 0.0, 128
  %712 = vxpose.xlu0.b32.cont [15/16] 0.0, 128
  %713 = vxpose.xlu0.b32.end [16/16] 0.0, 128
  %v714 = vpop.trf.xlu0
  %v715 = vpop.trf.xlu0
  %v716 = vpop.trf.xlu0
  %v717 = vpop.trf.xlu0
  %v718 = vpop.trf.xlu0
  %v719 = vpop.trf.xlu0
  %v720 = vpop.trf.xlu0
  %v721 = vpop.trf.xlu0
  %v722 = vpop.trf.xlu0
  %v723 = vpop.trf.xlu0
  %v724 = vpop.trf.xlu0
  %v725 = vpop.trf.xlu0
  %v726 = vpop.trf.xlu0
  %v727 = vpop.trf.xlu0
  %v728 = vpop.trf.xlu0
  %v729 = vpop.trf.xlu0
  %731 = vset.pattern.permute.xlu0 0
  %732 = vperm.xlu0 %731, %v690
  %v733 = vpop.permute.xlu0 %732
  %736 = vset.pattern.permute.xlu0 0
  %737 = vperm.xlu0 %736, %v695
  %v738 = vpop.permute.xlu0 %737
  %v740 = vlaneseq
  %v741 = vshrl.u32 %v740, 7
  %v742 = vsub.s32 1, %v741
  %v743 = vrot.slane %v714, %v742
  %v744 = vadd.f32 %v733, %v743
  %v745 = vadd.f32 %v738, %v743
  %vm746 = vcmp.gt.f32.partialorder %v744, 0.0
  %vm747 = vcmp.gt.f32.partialorder %v745, 0.0
  %v748 = vmul.f32 %v744, 0.2
  %v749 = vmul.f32 %v745, 0.2
  %v750 = vsel %vm746, %v744, %v748
  %v751 = vsel %vm747, %v745, %v749
  %v752 = vsel %vm259, %v750, -9e+15
  %v753 = vsel %vm260, %v751, -9e+15
  %v754 = vsel %vm115, %v752, -inf
  %755 = vmax.xlane.f32.xlu0 %v754
  %v756 = vpop.xlane.xlu0 %755
  %v757 = vsel %vm115, %v753, -inf
  %758 = vmax.xlane.f32.xlu0 %v757
  %v759 = vpop.xlane.xlu0 %758
  %v760 = vsub.f32 %v752, %v756
  %v761 = vsub.f32 %v753, %v759
  %v762 = vmul.f32 %v760, 1.442695
  %v763 = vpow.pop %v762
  %v764 = vmul.f32 %v761, 1.442695
  %v765 = vpow.pop %v764
  %v766 = vsel %vm115, %v763, 0.0
  %767 = vadd.xlane.f32.xlu0 %v766
  %v768 = vpop.xlane.xlu0 %767
  %v769 = vsel %vm115, %v765, 0.0
  %770 = vadd.xlane.f32.xlu0 %v769
  %v771 = vpop.xlane.xlu0 %770
  %v772 = vrcp.pop %v768
  %v773 = vrcp.pop %v771
  %v774 = vmul.f32 %v763, %v772
  %v775 = vmul.f32 %v765, %v773
  %v777 = vsel %vm115, %v774, 0
  %v780 = vsel %vm115, %v775, 0
  %782 = vmatprep.subr.mxu0 0.0
  %783 = vmatpush1.msra.mxu0 %v603
  %784 = vmatprep.subr.mxu0 0.0
  %785 = vmatpush1.msra.mxu0 %v608
  %786 = vmatprep.subr.mxu0 0.0
  %787 = vmatpush1.msra.mxu0 0.0
  %788 = vmatprep.subr.mxu0 0.0
  %789 = vmatpush1.msra.mxu0 0.0
  %790 = vmatprep.subr.mxu0 0.0
  %791 = vmatpush1.msra.mxu0 0.0
  %792 = vmatprep.subr.mxu0 0.0
  %793 = vmatpush1.msra.mxu0 0.0
  %794 = vmatprep.subr.mxu0 0.0
  %795 = vmatpush1.msra.mxu0 0.0
  %796 = vmatprep.subr.mxu0 0.0
  %797 = vmatpush1.msra.mxu0 0.0
  %798 = vmatprep.subr.mxu0 0.0
  %799 = vmatpush1.msra.mxu0 0.0
  %800 = vmatprep.subr.mxu0 0.0
  %801 = vmatpush1.msra.mxu0 0.0
  %802 = vmatprep.subr.mxu0 0.0
  %803 = vmatpush1.msra.mxu0 0.0
  %804 = vmatprep.subr.mxu0 0.0
  %805 = vmatpush1.msra.mxu0 0.0
  %806 = vmatprep.subr.mxu0 0.0
  %807 = vmatpush1.msra.mxu0 0.0
  %808 = vmatprep.subr.mxu0 0.0
  %809 = vmatpush1.msra.mxu0 0.0
  %810 = vmatprep.subr.mxu0 0.0
  %811 = vmatpush1.msra.mxu0 0.0
  %812 = vmatprep.subr.mxu0 0.0
  %813 = vmatpush1.msra.mxu0 0.0
  %814 = vmatprep.subr.mxu0 0.0
  %815 = vmatpush1.msra.mxu0 0.0
  %816 = vmatprep.subr.mxu0 0.0
  %817 = vmatpush1.msra.mxu0 0.0
  %818 = vmatprep.subr.mxu0 0.0
  %819 = vmatpush1.msra.mxu0 0.0
  %820 = vmatprep.subr.mxu0 0.0
  %821 = vmatpush1.msra.mxu0 0.0
  %822 = vmatprep.subr.mxu0 0.0
  %823 = vmatpush1.msra.mxu0 0.0
  %824 = vmatprep.subr.mxu0 0.0
  %825 = vmatpush1.msra.mxu0 0.0
  %826 = vmatprep.subr.mxu0 0.0
  %827 = vmatpush1.msra.mxu0 0.0
  %828 = vmatprep.subr.mxu0 0.0
  %829 = vmatpush1.msra.mxu0 0.0
  %830 = vmatprep.subr.mxu0 0.0
  %831 = vmatpush1.msra.mxu0 0.0
  %832 = vmatprep.subr.mxu0 0.0
  %833 = vmatpush1.msra.mxu0 0.0
  %834 = vmatprep.subr.mxu0 0.0
  %835 = vmatpush1.msra.mxu0 0.0
  %836 = vmatprep.subr.mxu0 0.0
  %837 = vmatpush1.msra.mxu0 0.0
  %838 = vmatprep.subr.mxu0 0.0
  %839 = vmatpush1.msra.mxu0 0.0
  %840 = vmatprep.subr.mxu0 0.0
  %841 = vmatpush1.msra.mxu0 0.0
  %842 = vmatprep.subr.mxu0 0.0
  %843 = vmatpush1.msra.mxu0 0.0
  %844 = vmatprep.subr.mxu0 0.0
  %845 = vmatpush1.msra.mxu0 0.0
  %846 = vmatprep.mubr.f32.mxu0 0.0
  %847 = vmatmul.mubr.f32.gmra.mrb[0].mxu0 %v777
  %v848 = vpop.f32.mrb[0].mxu0
  %v849 = vadd.f32 0.0, %v848
  %v850 = vpop.f32.mrb[0].mxu0
  %851 = vmatprep.mubr.f32.mxu0 0.0
  %852 = vmatmul.mubr.f32.gmra.mrb[0].mxu0 %v780
  %v853 = vpop.f32.mrb[0].mxu0
  %v854 = vadd.f32 0.0, %v853
  %v855 = vpop.f32.mrb[0].mxu0
  %856 = vdwg.mxu0
  %vm857 = vcmp.gt.f32.partialorder %v849, 0.0
  %vm858 = vcmp.gt.f32.partialorder %v854, 0.0
  %v859 = vmul.f32 %v849, 1.442695
  %v860 = vpow.pop %v859
  %v861 = vmul.f32 %v854, 1.442695
  %v862 = vpow.pop %v861
  %v863 = vsub.f32 %v860, 1.0
  %v864 = vsub.f32 %v862, 1.0
  %v865 = vsel %vm857, %v849, %v863
  %v866 = vsel %vm858, %v854, %v864
  %v867 = vsel %vm612, %v865, -inf
  %868 = vmax.xlane.f32.xlu0 %v867
  %v869 = vpop.xlane.xlu0 %868
  %v870 = vsel %vm612, %v866, -inf
  %871 = vmax.xlane.f32.xlu0 %v870
  %v872 = vpop.xlane.xlu0 %871
  %v873 = vsub.f32 %v865, %v869
  %v874 = vsub.f32 %v866, %v872
  %v875 = vmul.f32 %v873, 1.442695
  %v876 = vpow.pop %v875
  %v877 = vmul.f32 %v874, 1.442695
  %v878 = vpow.pop %v877
  %v879 = vsel %vm612, %v876, 0.0
  %880 = vadd.xlane.f32.xlu0 %v879
  %v881 = vpop.xlane.xlu0 %880
  %v882 = vsel %vm612, %v878, 0.0
  %883 = vadd.xlane.f32.xlu0 %v882
  %v884 = vpop.xlane.xlu0 %883
  %v885 = vlog2.pop %v881
  %v886 = vmul.f32 %v885, 0.6931472
  %v887 = vlog2.pop %v884
  %v888 = vmul.f32 %v887, 0.6931472
  %v889 = vsub.f32 %v873, %v886
  %v890 = vsub.f32 %v874, %v888
  %891 = vst.msk [vmem:[%s6] sm:$0xff] %vm612, %v889
  %892 = vst.msk [vmem:[%s6 + $0x8] sm:$0xff] %vm612, %v890
  // Predicated region
  $region26: #{tpu_custom_call.1} parent=0 // pred_check
    _
  $region27: #{tpu_custom_call.1} parent=0 // pred_check_branch
    %894 = sbr.rel (0) target = $region29
  $region28: #{tpu_custom_call.1} parent=0 // pred_region
    _
  $region29: #{tpu_custom_call.1} parent=0 // pred_fallthru
    _
  // Predicated region
  $region30: #{tpu_custom_call.1} parent=0 // pred_check
    _
  $region31: #{tpu_custom_call.1} parent=0 // pred_check_branch
    %896 = sbr.rel (0) target = $region33
  $region32: #{tpu_custom_call.1} parent=0 // pred_region
    _
  $region33: #{tpu_custom_call.1} parent=0 // pred_fallthru
    _

</llo_original>
